<compile_context>
chip_gen: v6e
topology: v6e:2x2x1
jax: 0.10.0
libtpu: 0.0.40
codegen_flags: <defaults>
</compile_context>

<pallas_src>
import math
import functools

import jax
import jax.numpy as jnp
from jax import lax
from jax.experimental import pallas as pl
from jax.experimental.pallas import tpu as pltpu


def _vmem_capacity_bytes():
    """Physical VMEM capacity (falls back to 128 MiB if the query is unavailable)."""
    try:
        info = pltpu.get_tpu_info()
        cap = getattr(info, "vmem_capacity_bytes", None)
        if cap:
            return int(cap)
    except Exception:
        pass
    return 128 * 1024 * 1024


def _pick_query_tile(S, vmem_bytes, has_mask):
    """Generation-aware query tile: bigger tiles on 128 MiB VMEM parts (v5e/v6e); on 64 MiB
    parts (v7x) cap TQ so the per-step f32 softmax temporaries (~3 * TQ*S*4 B) stay ~<=6 MiB."""
    if vmem_bytes >= 96 * 1024 * 1024:
        target = 512
    else:
        target = 256
        cap = (6 * 1024 * 1024) // (4 * max(S, 1))
        cap = max(32, (cap // 32) * 32)
        target = min(target, cap)
    if S <= target:
        return S
    # int8 mask tiles: keep the sublane (second-to-last) dim a multiple of 32.
    step_sizes = (32,) if has_mask else (32, 8)
    for step in step_sizes:
        start = (min(target, S) // step) * step
        for tq in range(start, step - 1, -step):
            if S % tq == 0:
                return tq
    # TODO(synk): pad S (and mask the tail rows) for awkward sequence lengths instead of
    # falling back to a single full-S tile (O(S^2) temporaries per step).
    return S


def _mixer_kernel(*refs, scale, tq, has_mask, causal):
    if has_mask:
        q_ref, k_ref, v_ref, mask_ref, out_ref, score_ref = refs
    else:
        q_ref, k_ref, v_ref, out_ref, score_ref = refs
        mask_ref = None

    q = q_ref[0]                                                        # (TQ, D) matmul dtype
    k = k_ref[0]                                                        # (S,  D) matmul dtype

    # scores: contract on D of both operands (no explicit transpose materialized)
    s = lax.dot_general(q, k, (((1,), (1,)), ((), ())),
                        preferred_element_type=jnp.float32) * scale      # (TQ, S) f32

    if causal:
        # Structured mask generated in-kernel: zero HBM traffic for the mask.
        S = k_ref.shape[1]
        row = pl.program_id(1) * tq + lax.broadcasted_iota(jnp.int32, (tq, S), 0)
        col = lax.broadcasted_iota(jnp.int32, (tq, S), 1)
        s = jnp.where(col > row, jnp.float32(-10000.0), s)
    elif has_mask:
        # int8 compared directly (no int8 -> int32 unpack on the VPU).
        s = jnp.where(mask_ref[0] == 0, jnp.float32(-10000.0), s)

    m = jnp.max(s, axis=-1, keepdims=True)
    e = jnp.exp(s - m)
    p = e * pl.reciprocal(jnp.sum(e, axis=-1, keepdims=True), approx=True)

    score_ref[0] = p.astype(score_ref.dtype)
    out_ref[0] = jnp.dot(p.astype(v_ref.dtype), v_ref[0],
                         preferred_element_type=jnp.float32).astype(out_ref.dtype)


def mixer_forward(x, params, aux_dim, mask=None, *, causal=False,
                  score_dtype=jnp.float32, use_bf16_matmul=False):
    """x: (B, S, 2*aux_dim).  params: Wq/Wk/Wv (out, in) and bq/bk/bv (out,).
    Returns (out (B,S,D) f32, score (B,S,S) score_dtype), matching Mixer.forward.
    `causal=True` generates a lower-triangular mask in-kernel (equivalent to passing
    mask = tril(ones) but with no mask HBM traffic)."""
    B, S, D = x.shape
    assert D == 2 * aux_dim
    assert not (causal and mask is not None), "pass either causal=True or an explicit mask"

    # ---- fused QKV projection, hoisted to one XLA matmul (tiny: K = D = 2*aux_dim) ----
    w_qkv = jnp.concatenate(
        [params["Wq"].T, params["Wk"].T, params["Wv"].T], axis=1).astype(x.dtype)
    b_qkv = jnp.concatenate(
        [params["bq"], params["bk"], params["bv"]]).astype(jnp.float32)
    qkv = jnp.dot(x, w_qkv, preferred_element_type=jnp.float32) + b_qkv   # (B, S, 3D) f32

    mm_dtype = x.dtype
    if use_bf16_matmul and mm_dtype == jnp.float32:
        mm_dtype = jnp.bfloat16          # bf16 MXU passes; accumulation stays f32
    q = qkv[..., 0:D].astype(mm_dtype)
    k = qkv[..., D:2 * D].astype(mm_dtype)
    v = qkv[..., 2 * D:3 * D].astype(mm_dtype)

    has_mask = mask is not None
    vmem_cap = _vmem_capacity_bytes()
    tq = _pick_query_tile(S, vmem_cap, has_mask)
    nq = S // tq

    inputs = [q, k, v]
    in_specs = [
        pl.BlockSpec((1, tq, D), lambda b, qi: (b, qi, 0)),   # q: per query tile
        pl.BlockSpec((1, S, D), lambda b, qi: (b, 0, 0)),     # k: per-batch resident block
        pl.BlockSpec((1, S, D), lambda b, qi: (b, 0, 0)),     # v: per-batch resident block
    ]

    if has_mask:
        m = jnp.asarray(mask)
        if m.ndim == 2:
            m = m[None]
        mb = m.shape[0]
        m = jnp.broadcast_to(m, (mb, S, S)).astype(jnp.int8)  # int8: 4x less HBM traffic
        inputs.append(m)
        if mb == 1:     # batch-shared mask: batch-independent index_map
            in_specs.append(pl.BlockSpec((1, tq, S), lambda b, qi: (0, qi, 0)))
        else:
            assert mb == B, "mask batch dim must be 1 or B"
            in_specs.append(pl.BlockSpec((1, tq, S), lambda b, qi: (b, qi, 0)))

    out_specs = [
        pl.BlockSpec((1, tq, D), lambda b, qi: (b, qi, 0)),   # out (= score @ v)
        pl.BlockSpec((1, tq, S), lambda b, qi: (b, qi, 0)),   # score (softmax probs)
    ]

    kernel = functools.partial(_mixer_kernel, scale=1.0 / math.sqrt(aux_dim),
                               tq=tq, has_mask=has_mask, causal=causal)

    # Advisory cost estimate for the XLA scheduler (attention part only; QKV is outside).
    mm_bytes = jnp.dtype(mm_dtype).itemsize
    score_bytes = jnp.dtype(score_dtype).itemsize
    flops = 2 * 2 * B * S * S * D
    bytes_accessed = (3 * B * S * D * mm_bytes + B * S * D * 4
                      + B * S * S * score_bytes
                      + (B * S * S if has_mask else 0))
    cost = pl.CostEstimate(flops=flops, transcendentals=B * S * S,
                           bytes_accessed=bytes_accessed)

    grid_spec = pltpu.PrefetchScalarGridSpec(
        num_scalar_prefetch=0,
        grid=(B, nq),
        in_specs=in_specs,
        out_specs=out_specs,
    )

    out, score = pl.pallas_call(
        kernel,
        out_shape=(
            jax.ShapeDtypeStruct((B, S, D), jnp.float32),
            jax.ShapeDtypeStruct((B, S, S), score_dtype),
        ),
        grid_spec=grid_spec,
        compiler_params=pltpu.CompilerParams(
            dimension_semantics=("parallel", "parallel"),
            vmem_limit_bytes=min(int(vmem_cap * 3 // 4), 100 * 1024 * 1024),
        ),
        cost_estimate=cost,
    )(*inputs)
    return out, score


def init_mixer_params(key, aux_dim):
    """Deterministic init mimicking nn.Linear default (uniform(-1/sqrt(in), 1/sqrt(in)))."""
    D = 2 * aux_dim
    bound = 1.0 / math.sqrt(D)
    keys = jax.random.split(key, 6)
    return {
        "Wq": jax.random.uniform(keys[0], (D, D), jnp.float32, -bound, bound),
        "bq": jax.random.uniform(keys[1], (D,), jnp.float32, -bound, bound),
        "Wk": jax.random.uniform(keys[2], (D, D), jnp.float32, -bound, bound),
        "bk": jax.random.uniform(keys[3], (D,), jnp.float32, -bound, bound),
        "Wv": jax.random.uniform(keys[4], (D, D), jnp.float32, -bound, bound),
        "bv": jax.random.uniform(keys[5], (D,), jnp.float32, -bound, bound),
    }


def _reference(x, params, aux_dim, mask=None):
    # pure-JAX reference matching the PyTorch forward exactly
    q = x @ params["Wq"].T + params["bq"]
    k = x @ params["Wk"].T + params["bk"]
    v = x @ params["Wv"].T + params["bv"]
    score = q @ jnp.swapaxes(k, 2, 1) / math.sqrt(aux_dim)
    if mask is not None:
        score = jnp.where(mask == 0, -10000.0, score)
    score = jax.nn.softmax(score, axis=-1)
    return score @ v, score


if __name__ == "__main__":
    aux_dim = 16            # D = 2*aux_dim = 32
    key = jax.random.PRNGKey(0)
    k_x, k_p, k_x2 = jax.random.split(key, 3)
    params = init_mixer_params(k_p, aux_dim)

    # --- small case, no mask ----------------------------------------------------
    B, S = 2, 8
    x = jax.random.normal(k_x, (B, S, 2 * aux_dim), dtype=jnp.float32)
    out, score = mixer_forward(x, params, aux_dim, mask=None)
    out = jax.block_until_ready(out)
    score = jax.block_until_ready(score)
    ref_out, ref_score = _reference(x, params, aux_dim, mask=None)
    assert jnp.allclose(out, ref_out, atol=3e-3, rtol=3e-3), "no-mask out mismatch"
    assert jnp.allclose(score, ref_score, atol=1e-3, rtol=1e-3), "no-mask score mismatch"

    # --- small case, per-batch explicit mask (int8 DMA path, mb == B) ------------
    mask_b = jnp.broadcast_to(jnp.tril(jnp.ones((S, S), jnp.int32)), (B, S, S))
    out_m, score_m = mixer_forward(x, params, aux_dim, mask=mask_b)
    out_m = jax.block_until_ready(out_m)
    ref_out_m, ref_score_m = _reference(x, params, aux_dim, mask=mask_b)
    assert jnp.allclose(out_m, ref_out_m, atol=3e-3, rtol=3e-3), "masked out mismatch"
    assert jnp.allclose(score_m, ref_score_m, atol=1e-3, rtol=1e-3), "masked score mismatch"

    # --- small case, batch-shared explicit 2-D mask (mb == 1 index_map path) -----
    out_s, score_s = mixer_forward(x, params, aux_dim, mask=jnp.tril(jnp.ones((S, S), jnp.int32)))
    out_s = jax.block_until_ready(out_s)
    assert jnp.allclose(out_s, ref_out_m, atol=3e-3, rtol=3e-3), "shared-mask out mismatch"
    assert jnp.allclose(score_s, ref_score_m, atol=1e-3, rtol=1e-3), "shared-mask score mismatch"

    # --- tiled case (multiple query tiles), in-kernel causal mask (no mask DMA) --
    B2, S2 = 1, 1024
    x2 = jax.random.normal(k_x2, (B2, S2, 2 * aux_dim), dtype=jnp.float32)
    out_t, score_t = mixer_forward(x2, params, aux_dim, causal=True)
    out_t = jax.block_until_ready(out_t)
    ref_out_t, ref_score_t = _reference(
        x2, params, aux_dim, mask=jnp.tril(jnp.ones((S2, S2), jnp.int32)))
    assert jnp.allclose(out_t, ref_out_t, atol=3e-3, rtol=3e-3), "causal out mismatch"
    assert jnp.allclose(score_t, ref_score_t, atol=1e-3, rtol=1e-3), "causal score mismatch"

    # --- optional knobs smoke test: bf16 attention matmuls + bf16 score ----------
    out_b, score_b = mixer_forward(x, params, aux_dim, mask=None,
                                   score_dtype=jnp.bfloat16, use_bf16_matmul=True)
    out_b = jax.block_until_ready(out_b)
    assert jnp.allclose(out_b, ref_out, atol=3e-2, rtol=3e-2), "bf16 out mismatch"
    assert jnp.allclose(score_b.astype(jnp.float32), ref_score, atol=2e-2, rtol=2e-2), \
        "bf16 score mismatch"

    print("KERNEL_OK")
</pallas_src>

<mosaic_0001>
module attributes {stable_mosaic.version = 11 : i64} {
  func.func @_mixer_kernel(%arg0: i32, %arg1: i32, %arg2: memref<1x8x32xf32, #tpu.memory_space<vmem>>, %arg3: memref<1x8x32xf32, #tpu.memory_space<vmem>>, %arg4: memref<1x8x32xf32, #tpu.memory_space<vmem>>, %arg5: memref<1x8x32xf32, #tpu.memory_space<vmem>>, %arg6: memref<1x8x8xf32, #tpu.memory_space<vmem>>) attributes {dimension_semantics = [#tpu.dimension_semantics<parallel>, #tpu.dimension_semantics<parallel>], iteration_bounds = array<i64: 2, 1>, scalar_prefetch = 0 : i64, scratch_operands = 0 : i64, tpu.core_type = #tpu.core_type<tc>, window_params = [{transform_indices = @transform_0, window_bounds = array<i64: 1, 8, 32>}, {transform_indices = @transform_1, window_bounds = array<i64: 1, 8, 32>}, {transform_indices = @transform_2, window_bounds = array<i64: 1, 8, 32>}, {transform_indices = @transform_3, window_bounds = array<i64: 1, 8, 32>}, {transform_indices = @transform_4, window_bounds = array<i64: 1, 8, 8>}]} {
    %c0 = arith.constant 0 : index
    %c0_0 = arith.constant 0 : index
    %c0_1 = arith.constant 0 : index
    %0 = vector.load %arg2[%c0, %c0_0, %c0_1] : memref<1x8x32xf32, #tpu.memory_space<vmem>>, vector<1x8x32xf32>
    %1 = vector.shape_cast %0 : vector<1x8x32xf32> to vector<8x32xf32>
    %c0_2 = arith.constant 0 : index
    %c0_3 = arith.constant 0 : index
    %c0_4 = arith.constant 0 : index
    %2 = vector.load %arg3[%c0_2, %c0_3, %c0_4] : memref<1x8x32xf32, #tpu.memory_space<vmem>>, vector<1x8x32xf32>
    %3 = vector.shape_cast %2 : vector<1x8x32xf32> to vector<8x32xf32>
    %cst = arith.constant dense<0.000000e+00> : vector<8x8xf32>
    %4 = tpu.matmul %1, %3, %cst {dimension_numbers = #tpu.dot_dimension_numbers<[1], [1], [0], [0], [0, 0, 1, 0], [], []>} : vector<8x32xf32>, vector<8x32xf32>, vector<8x8xf32> -> vector<8x8xf32>
    %cst_5 = arith.constant 2.500000e-01 : f32
    %5 = vector.broadcast %cst_5 : f32 to vector<8x8xf32>
    %6 = arith.mulf %4, %5 : vector<8x8xf32>
    %cst_6 = arith.constant dense<0xFF800000> : vector<8xf32>
    %7 = vector.multi_reduction <maximumf>, %6, %cst_6 [1] : vector<8x8xf32> to vector<8xf32>
    %8 = vector.shape_cast %7 : vector<8xf32> to vector<8x1xf32>
    %9 = vector.broadcast %8 : vector<8x1xf32> to vector<8x8xf32>
    %10 = arith.subf %6, %9 : vector<8x8xf32>
    %11 = math.exp %10 : vector<8x8xf32>
    %cst_7 = arith.constant dense<0.000000e+00> : vector<8xf32>
    %12 = vector.multi_reduction <add>, %11, %cst_7 [1] : vector<8x8xf32> to vector<8xf32>
    %13 = vector.shape_cast %12 : vector<8xf32> to vector<8x1xf32>
    %14 = tpu.reciprocal %13 {approx = true} : vector<8x1xf32> -> vector<8x1xf32>
    %15 = vector.broadcast %14 : vector<8x1xf32> to vector<8x8xf32>
    %16 = arith.mulf %11, %15 : vector<8x8xf32>
    %c0_8 = arith.constant 0 : index
    %c0_9 = arith.constant 0 : index
    %c0_10 = arith.constant 0 : index
    %17 = vector.load %arg6[%c0_8, %c0_9, %c0_10] : memref<1x8x8xf32, #tpu.memory_space<vmem>>, vector<1x8x8xf32>
    %18 = vector.shape_cast %17 : vector<1x8x8xf32> to vector<8x8xf32>
    %19 = vector.shape_cast %16 : vector<8x8xf32> to vector<1x8x8xf32>
    tpu.vector_store %arg6[%c0_8, %c0_9, %c0_10], %19 {strides = array<i32>} : memref<1x8x8xf32, #tpu.memory_space<vmem>>, vector<1x8x8xf32>,
    %c0_11 = arith.constant 0 : index
    %c0_12 = arith.constant 0 : index
    %c0_13 = arith.constant 0 : index
    %20 = vector.load %arg4[%c0_11, %c0_12, %c0_13] : memref<1x8x32xf32, #tpu.memory_space<vmem>>, vector<1x8x32xf32>
    %21 = vector.shape_cast %20 : vector<1x8x32xf32> to vector<8x32xf32>
    %cst_14 = arith.constant dense<0.000000e+00> : vector<8x32xf32>
    %22 = tpu.matmul %16, %21, %cst_14 {dimension_numbers = #tpu.dot_dimension_numbers<[1], [0], [0], [1], [0, 0, 1, 1], [], []>} : vector<8x8xf32>, vector<8x32xf32>, vector<8x32xf32> -> vector<8x32xf32>
    %c0_15 = arith.constant 0 : index
    %c0_16 = arith.constant 0 : index
    %c0_17 = arith.constant 0 : index
    %23 = vector.load %arg5[%c0_15, %c0_16, %c0_17] : memref<1x8x32xf32, #tpu.memory_space<vmem>>, vector<1x8x32xf32>
    %24 = vector.shape_cast %23 : vector<1x8x32xf32> to vector<8x32xf32>
    %25 = vector.shape_cast %22 : vector<8x32xf32> to vector<1x8x32xf32>
    tpu.vector_store %arg5[%c0_15, %c0_16, %c0_17], %25 {strides = array<i32>} : memref<1x8x32xf32, #tpu.memory_space<vmem>>, vector<1x8x32xf32>,
    return
  }
  func.func @transform_0(%arg0: i32, %arg1: i32) -> (i32, i32, i32) {
    %c0_i32 = arith.constant 0 : i32
    %c0_i32_0 = arith.constant 0 : i32
    return %arg0, %arg1, %c0_i32 : i32, i32, i32
  }
  func.func @transform_1(%arg0: i32, %arg1: i32) -> (i32, i32, i32) {
    %c0_i32 = arith.constant 0 : i32
    %c0_i32_0 = arith.constant 0 : i32
    %c0_i32_1 = arith.constant 0 : i32
    return %arg0, %c0_i32, %c0_i32_0 : i32, i32, i32
  }
  func.func @transform_2(%arg0: i32, %arg1: i32) -> (i32, i32, i32) {
    %c0_i32 = arith.constant 0 : i32
    %c0_i32_0 = arith.constant 0 : i32
    %c0_i32_1 = arith.constant 0 : i32
    return %arg0, %c0_i32, %c0_i32_0 : i32, i32, i32
  }
  func.func @transform_3(%arg0: i32, %arg1: i32) -> (i32, i32, i32) {
    %c0_i32 = arith.constant 0 : i32
    %c0_i32_0 = arith.constant 0 : i32
    return %arg0, %arg1, %c0_i32 : i32, i32, i32
  }
  func.func @transform_4(%arg0: i32, %arg1: i32) -> (i32, i32, i32) {
    %c0_i32 = arith.constant 0 : i32
    %c0_i32_0 = arith.constant 0 : i32
    return %arg0, %arg1, %c0_i32 : i32, i32, i32
  }
}

</mosaic_0001>

<llo_original>
// kernel: tpu_custom_call.1
$region0: #{tpu_custom_call.1}
  #allocation0 [shape = 'u32[]', space=smem, size = 0x4, offset = 0x4, fixed_abs, tag = 'smem constant byte address 0x4 - core index']
  #allocation1 [shape = 'u32[144,128]{1,0:T(1,128)}', space=vmem, size = 0x12000, scoped, tag = 'internal scratch']
  %s0 = inlined_call_operand.hbm [shape: f32[2,8,32], index: 0, kind: input, shape index: {}]
  %s1 = inlined_call_operand.hbm [shape: f32[2,8,32], index: 1, kind: input, shape index: {}]
  %s2 = inlined_call_operand.hbm [shape: f32[2,8,32], index: 2, kind: input, shape index: {}]
  %s3 = inlined_call_operand.hbm [shape: f32[2,8,32], index: 3, kind: output, shape index: {0}]
  %s4 = inlined_call_operand.hbm [shape: f32[2,8,8], index: 4, kind: output, shape index: {1}]
  %5 = xla_tuple %s3, %s4
  %s6 = sld [smem:[#allocation0]]
  $region65: #{tpu_custom_call.1} parent=0
    _
  %s8 = ssub.s32 1, %s6
  %s9 = scalar_select 0, %s8, %s6
  $region1: #{tpu_custom_call.1} parent=0
    #allocation2 [shape = 'u8[8192]{0}', space=vmem, size = 0x2000, scoped, tag = 'input window, operand 0']
    #allocation3 [shape = 's32[2]{0}', space=sflag, size = 0x8, scoped, tag = 'scoped memory for tpu_custom_call.1']
    #allocation4 [shape = 's32[2]{0}', space=sflag, size = 0x8, scoped, tag = 'scoped memory for tpu_custom_call.1']
    #allocation5 [shape = 'u8[8192]{0}', space=vmem, size = 0x2000, scoped, tag = 'input window, operand 1']
    #allocation6 [shape = 's32[2]{0}', space=sflag, size = 0x8, scoped, tag = 'scoped memory for tpu_custom_call.1']
    #allocation7 [shape = 'u8[8192]{0}', space=vmem, size = 0x2000, scoped, tag = 'input window, operand 2']
    #allocation8 [shape = 'u8[8192]{0}', space=vmem, size = 0x2000, scoped, tag = 'output window, operand 0']
    #allocation9 [shape = 'u8[8192]{0}', space=vmem, size = 0x2000, scoped, tag = 'output window, operand 1']
    #allocation10 [shape = 's32[2]{0}', space=sflag, size = 0x8, scoped, tag = 'scoped memory for tpu_custom_call.1']
    %10 = vsyncpa [#allocation3], 0
    %s11 = scalar_lea.sflag [#allocation3], 1
    %12 = vsyncpa %s11, 0
    %13 = vsyncpa [#allocation6], 0
    %s14 = scalar_lea.sflag [#allocation6], 1
    %15 = vsyncpa %s14, 0
    %16 = vsyncpa [#allocation4], 0
    %s17 = scalar_lea.sflag [#allocation4], 1
    %18 = vsyncpa %s17, 0
    %19 = vsyncpa [#allocation10], 0
    %s20 = scalar_lea.sflag [#allocation10], 1
    %21 = vsyncpa %s20, 0
    loop: start=0, step=1, limit=4
    $region2: #{tpu_custom_call.1} parent=1 // loop_pre_header
      _
    $region3: #{tpu_custom_call.1} parent=1 // loop_header
      %s23 = sphi 0, %s27
      %p24 = scmp.ge.s32.totalorder %s23, 4
      %s30 = sphi 0, %s42
      %s31 = sphi 0, %s38
      %s32 = sphi 0, %s30
      %s33 = sphi 0, %s31
      %s34 = sphi 0, %s32
      %s35 = sphi 0, %s33
      %s47 = sphi 0, %s49
      %s50 = sphi 0, %s47
      %s51 = sphi 0, %s50
      %s67 = sphi 0, %s51
      %s73 = sphi 0, %s75
      %s76 = sphi 0, %s73
      %s77 = sphi 0, %s76
      %s93 = sphi 0, %s77
      %s99 = sphi 0, %s101
      %s102 = sphi 0, %s99
      %s103 = sphi 0, %s102
      %s119 = sphi 0, %s103
      %s127 = sphi 0, %s129
      %s130 = sphi 0, %s127
      %s131 = sphi 0, %s130
      %s147 = sphi 0, %s131
      %s155 = sphi 0, %s157
      %s158 = sphi 0, %s155
      %s159 = sphi 0, %s158
      %s175 = sphi 0, %s159
    $region4: #{tpu_custom_call.1} parent=1 // loop_header_branch
      %26 = sbr.rel (%p24) target = $region8
    $region5: #{tpu_custom_call.1} parent=1 // loop_body
      %s28 = ssub.s32 %s23, 1
      %s29 = ssub.s32 %s23, 2
      %s36 = sadd.s32 1, %s31
      %p37 = scmp.ge.s32.totalorder %s36, 1
      %s38 = scalar_select %p37, 0, %s36
      %s39 = sadd.s32 1, %s30
      %s40 = scalar_select %p37, %s39, %s30
      %p41 = scmp.ge.s32.totalorder %s40, 2
      %s42 = scalar_select %p41, 0, %s40
      %s43 = ssub.s32 %s30, %s42
      %s44 = ssub.s32 %s31, %s38
      %s45 = sor.u32 %s43, %s44
      %p46 = scmp.eq.s32.totalorder %s45, 0
      %s48 = sadd.s32 %s47, 1
      %s49 = scalar_select %p46, %s47, %s48
      %p52 = pneg %p46
      %p53 = scmp.eq.s32.totalorder %s23, 1
      %p54 = por %p52, %p53
      %p55 = scmp.ne.s32.totalorder %s47, %s50
      %p56 = scmp.eq.s32.totalorder %s23, 0
      %p57 = por %p55, %p56
      %p58 = scmp.ne.s32.totalorder %s47, %s50
      %p59 = scmp.eq.s32.totalorder %s28, 1
      %p60 = por %p58, %p59
      %p61 = scmp.ne.s32.totalorder %s50, %s51
      %p62 = scmp.eq.s32.totalorder %s28, 0
      %p63 = por %p61, %p62
      %p64 = scmp.ne.s32.totalorder %s50, %s51
      %p65 = scmp.eq.s32.totalorder %s29, 1
      %p66 = por %p64, %p65
      %p68 = scmp.ne.s32.totalorder %s51, %s67
      %p69 = scmp.eq.s32.totalorder %s29, 0
      %p70 = por %p68, %p69
      %s71 = ssub.s32 %s30, %s42
      %p72 = scmp.eq.s32.totalorder %s71, 0
      %s74 = sadd.s32 %s73, 1
      %s75 = scalar_select %p72, %s73, %s74
      %p78 = pneg %p72
      %p79 = scmp.eq.s32.totalorder %s23, 1
      %p80 = por %p78, %p79
      %p81 = scmp.ne.s32.totalorder %s73, %s76
      %p82 = scmp.eq.s32.totalorder %s23, 0
      %p83 = por %p81, %p82
      %p84 = scmp.ne.s32.totalorder %s73, %s76
      %p85 = scmp.eq.s32.totalorder %s28, 1
      %p86 = por %p84, %p85
      %p87 = scmp.ne.s32.totalorder %s76, %s77
      %p88 = scmp.eq.s32.totalorder %s28, 0
      %p89 = por %p87, %p88
      %p90 = scmp.ne.s32.totalorder %s76, %s77
      %p91 = scmp.eq.s32.totalorder %s29, 1
      %p92 = por %p90, %p91
      %p94 = scmp.ne.s32.totalorder %s77, %s93
      %p95 = scmp.eq.s32.totalorder %s29, 0
      %p96 = por %p94, %p95
      %s97 = ssub.s32 %s30, %s42
      %p98 = scmp.eq.s32.totalorder %s97, 0
      %s100 = sadd.s32 %s99, 1
      %s101 = scalar_select %p98, %s99, %s100
      %p104 = pneg %p98
      %p105 = scmp.eq.s32.totalorder %s23, 1
      %p106 = por %p104, %p105
      %p107 = scmp.ne.s32.totalorder %s99, %s102
      %p108 = scmp.eq.s32.totalorder %s23, 0
      %p109 = por %p107, %p108
      %p110 = scmp.ne.s32.totalorder %s99, %s102
      %p111 = scmp.eq.s32.totalorder %s28, 1
      %p112 = por %p110, %p111
      %p113 = scmp.ne.s32.totalorder %s102, %s103
      %p114 = scmp.eq.s32.totalorder %s28, 0
      %p115 = por %p113, %p114
      %p116 = scmp.ne.s32.totalorder %s102, %s103
      %p117 = scmp.eq.s32.totalorder %s29, 1
      %p118 = por %p116, %p117
      %p120 = scmp.ne.s32.totalorder %s103, %s119
      %p121 = scmp.eq.s32.totalorder %s29, 0
      %p122 = por %p120, %p121
      %s123 = ssub.s32 %s30, %s42
      %s124 = ssub.s32 %s31, %s38
      %s125 = sor.u32 %s123, %s124
      %p126 = scmp.eq.s32.totalorder %s125, 0
      %s128 = sadd.s32 %s127, 1
      %s129 = scalar_select %p126, %s127, %s128
      %p132 = pneg %p126
      %p133 = scmp.eq.s32.totalorder %s23, 1
      %p134 = por %p132, %p133
      %p135 = scmp.ne.s32.totalorder %s127, %s130
      %p136 = scmp.eq.s32.totalorder %s23, 0
      %p137 = por %p135, %p136
      %p138 = scmp.ne.s32.totalorder %s127, %s130
      %p139 = scmp.eq.s32.totalorder %s28, 1
      %p140 = por %p138, %p139
      %p141 = scmp.ne.s32.totalorder %s130, %s131
      %p142 = scmp.eq.s32.totalorder %s28, 0
      %p143 = por %p141, %p142
      %p144 = scmp.ne.s32.totalorder %s130, %s131
      %p145 = scmp.eq.s32.totalorder %s29, 1
      %p146 = por %p144, %p145
      %p148 = scmp.ne.s32.totalorder %s131, %s147
      %p149 = scmp.eq.s32.totalorder %s29, 0
      %p150 = por %p148, %p149
      %s151 = ssub.s32 %s30, %s42
      %s152 = ssub.s32 %s31, %s38
      %s153 = sor.u32 %s151, %s152
      %p154 = scmp.eq.s32.totalorder %s153, 0
      %s156 = sadd.s32 %s155, 1
      %s157 = scalar_select %p154, %s155, %s156
      %p160 = pneg %p154
      %p161 = scmp.eq.s32.totalorder %s23, 1
      %p162 = por %p160, %p161
      %p163 = scmp.ne.s32.totalorder %s155, %s158
      %p164 = scmp.eq.s32.totalorder %s23, 0
      %p165 = por %p163, %p164
      %p166 = scmp.ne.s32.totalorder %s155, %s158
      %p167 = scmp.eq.s32.totalorder %s28, 1
      %p168 = por %p166, %p167
      %p169 = scmp.ne.s32.totalorder %s158, %s159
      %p170 = scmp.eq.s32.totalorder %s28, 0
      %p171 = por %p169, %p170
      %p172 = scmp.ne.s32.totalorder %s158, %s159
      %p173 = scmp.eq.s32.totalorder %s29, 1
      %p174 = por %p172, %p173
      %p176 = scmp.ne.s32.totalorder %s159, %s175
      %p177 = scmp.eq.s32.totalorder %s29, 0
      %p178 = por %p176, %p177
      %p179 = scmp.le.s32.totalorder 1, %s23
      %p180 = scmp.lt.s32.totalorder %s23, 3
      %p181 = pnand %p179, %p180
      %p182 = pneg %p181
      // Predicated region
      $region9: #{tpu_custom_call.1} parent=5 // pred_check
        _
      $region10: #{tpu_custom_call.1} parent=5 // pred_check_branch
        %184 = sbr.rel (%p181) target = $region12
      $region11: #{tpu_custom_call.1} parent=5 // pred_region
        %s185 = ssub.s32 %s23, 1
      $region12: #{tpu_custom_call.1} parent=5 // pred_fallthru
        _
      %p186 = scmp.lt.s32.totalorder %s23, 2
      // Predicated region
      $region13: #{tpu_custom_call.1} parent=5 // pred_check
        %p187 = pneg %p186
      $region14: #{tpu_custom_call.1} parent=5 // pred_check_branch
        %189 = sbr.rel (%p187) target = $region16
      $region15: #{tpu_custom_call.1} parent=5 // pred_region
        // Predicated region
        $region17: #{tpu_custom_call.1} parent=15 // pred_check
          %p190 = pneg %p57
        $region18: #{tpu_custom_call.1} parent=15 // pred_check_branch
          %192 = sbr.rel (%p190) target = $region20
        $region19: #{tpu_custom_call.1} parent=15 // pred_region
          %s193 = sand.u32 %s47, 1
          %s194 = scalar_lea.sflag [#allocation3], %s193
          %s195 = sand.u32 %s47, 1
          %s196 = smul.addr %s195, 8
          %s197 = scalar_lea.vmem [#allocation2], %s196
          %s199 = ssub.s32 128, 128
          %200 = vsyncadd %s194, %s199
          %s201 = sadd.s32 %s31, %s30
          %s202 = smul.addr %s201, 128
          %s203 = scalar_lea.hbm %s0, %s202
          %s205 = sshll.u32 %s197, 4
          %s206 = int_to_ptr.vmem [resolvable:$true] %s205
          %208 = dma.hbm_to_vmem [thread:$0]  %s203, 128, %s206, %s194
        $region20: #{tpu_custom_call.1} parent=15 // pred_fallthru
          _
        // Predicated region
        $region21: #{tpu_custom_call.1} parent=15 // pred_check
          %p209 = pneg %p83
        $region22: #{tpu_custom_call.1} parent=15 // pred_check_branch
          %211 = sbr.rel (%p209) target = $region24
        $region23: #{tpu_custom_call.1} parent=15 // pred_region
          %s212 = sand.u32 %s23, 1
          %s213 = scalar_lea.sflag [#allocation6], %s212
          %s214 = sand.u32 %s73, 1
          %s215 = smul.addr %s214, 8
          %s216 = scalar_lea.vmem [#allocation5], %s215
          %s218 = ssub.s32 128, 128
          %219 = vsyncadd %s213, %s218
          %s220 = smul.addr %s30, 128
          %s221 = scalar_lea.hbm %s1, %s220
          %s223 = sshll.u32 %s216, 4
          %s224 = int_to_ptr.vmem [resolvable:$true] %s223
          %226 = dma.hbm_to_vmem [thread:$0]  %s221, 128, %s224, %s213
        $region24: #{tpu_custom_call.1} parent=15 // pred_fallthru
          _
        // Predicated region
        $region25: #{tpu_custom_call.1} parent=15 // pred_check
          %p227 = pneg %p109
        $region26: #{tpu_custom_call.1} parent=15 // pred_check_branch
          %229 = sbr.rel (%p227) target = $region28
        $region27: #{tpu_custom_call.1} parent=15 // pred_region
          %s230 = sand.u32 %s23, 1
          %s231 = scalar_lea.sflag [#allocation6], %s230
          %s232 = sand.u32 %s99, 1
          %s233 = smul.addr %s232, 8
          %s234 = scalar_lea.vmem [#allocation7], %s233
          %s236 = ssub.s32 128, 128
          %237 = vsyncadd %s231, %s236
          %s238 = smul.addr %s30, 128
          %s239 = scalar_lea.hbm %s2, %s238
          %s241 = sshll.u32 %s234, 4
          %s242 = int_to_ptr.vmem [resolvable:$true] %s241
          %244 = dma.hbm_to_vmem [thread:$0]  %s239, 128, %s242, %s231
        $region28: #{tpu_custom_call.1} parent=15 // pred_fallthru
          _
      $region16: #{tpu_custom_call.1} parent=5 // pred_fallthru
        _
      %p245 = scmp.le.s32.totalorder 1, %s23
      %p246 = scmp.lt.s32.totalorder %s23, 3
      %p247 = pnand %p245, %p246
      %p248 = pneg %p247
      // Predicated region
      $region29: #{tpu_custom_call.1} parent=5 // pred_check
        _
      $region30: #{tpu_custom_call.1} parent=5 // pred_check_branch
        %250 = sbr.rel (%p247) target = $region32
      $region31: #{tpu_custom_call.1} parent=5 // pred_region
        %s251 = ssub.s32 %s23, 1
        %s252 = sand.u32 %s50, 1
        %s253 = scalar_lea.sflag [#allocation3], %s252
        %s254 = sand.u32 %s50, 1
        %s255 = smul.addr %s254, 8
        %s256 = scalar_lea.vmem [#allocation2], %s255
        // Predicated region
        $region33: #{tpu_custom_call.1} parent=31 // pred_check
          %p257 = pneg %p63
        $region34: #{tpu_custom_call.1} parent=31 // pred_check_branch
          %259 = sbr.rel (%p257) target = $region36
        $region35: #{tpu_custom_call.1} parent=31 // pred_region
          %260 = dma.done %s253, 128
        $region36: #{tpu_custom_call.1} parent=31 // pred_fallthru
          _
        %s261 = sand.u32 %s28, 1
        %s262 = scalar_lea.sflag [#allocation6], %s261
        %s263 = sand.u32 %s76, 1
        %s264 = smul.addr %s263, 8
        %s265 = scalar_lea.vmem [#allocation5], %s264
        // Predicated region
        $region37: #{tpu_custom_call.1} parent=31 // pred_check
          %p266 = pneg %p89
        $region38: #{tpu_custom_call.1} parent=31 // pred_check_branch
          %268 = sbr.rel (%p266) target = $region40
        $region39: #{tpu_custom_call.1} parent=31 // pred_region
          %269 = dma.done %s262, 128
        $region40: #{tpu_custom_call.1} parent=31 // pred_fallthru
          _
        %s270 = sand.u32 %s28, 1
        %s271 = scalar_lea.sflag [#allocation6], %s270
        %s272 = sand.u32 %s102, 1
        %s273 = smul.addr %s272, 8
        %s274 = scalar_lea.vmem [#allocation7], %s273
        // Predicated region
        $region41: #{tpu_custom_call.1} parent=31 // pred_check
          %p275 = pneg %p115
        $region42: #{tpu_custom_call.1} parent=31 // pred_check_branch
          %277 = sbr.rel (%p275) target = $region44
        $region43: #{tpu_custom_call.1} parent=31 // pred_region
          %278 = dma.done %s271, 128
        $region44: #{tpu_custom_call.1} parent=31 // pred_fallthru
          _
        %s279 = sand.u32 %s50, 1
        %s280 = scalar_lea.sflag [#allocation3], %s279
        %s281 = sand.u32 %s50, 1
        %s282 = smul.addr %s281, 8
        %s283 = scalar_lea.vmem [#allocation2], %s282
        %p284 = pneg %p63
        %p285 = pneg %p60
        %s286 = sand.u32 %s28, 1
        %s287 = scalar_lea.sflag [#allocation6], %s286
        %s288 = sand.u32 %s76, 1
        %s289 = smul.addr %s288, 8
        %s290 = scalar_lea.vmem [#allocation5], %s289
        %p291 = pneg %p89
        %p292 = pneg %p86
        %s293 = sand.u32 %s28, 1
        %s294 = scalar_lea.sflag [#allocation6], %s293
        %s295 = sand.u32 %s102, 1
        %s296 = smul.addr %s295, 8
        %s297 = scalar_lea.vmem [#allocation7], %s296
        %p298 = pneg %p115
        %p299 = pneg %p112
        %p300 = pneg %p143
        %p301 = pneg %p140
        %s302 = sand.u32 %s130, 1
        %s303 = scalar_lea.sflag [#allocation4], %s302
        %s304 = sand.u32 %s130, 1
        %s305 = smul.addr %s304, 8
        %s306 = scalar_lea.vmem [#allocation8], %s305
        %p307 = pneg %p171
        %p308 = pneg %p168
        %s309 = sand.u32 %s158, 1
        %s310 = scalar_lea.sflag [#allocation10], %s309
        %s311 = sand.u32 %s158, 1
        %s312 = smul.addr %s311, 8
        %s313 = scalar_lea.vmem [#allocation9], %s312
        %v314 = vld [vmem:[%s256] sm:$0xff]
        %v315 = vld [vmem:[%s265] sm:$0xff]
        %vm316 = vcmask 261120
        %v318 = vsel %vm316, %v314, 0
        %v321 = vsel %vm316, %v315, 0
        %323 = vmatprep.subr.mxu0 0.0
        %324 = vmatpush1.xpose.msra.mxu0 0.0
        %325 = vmatprep.subr.mxu0 0.0
        %326 = vmatpush1.xpose.msra.mxu0 0.0
        %327 = vmatprep.subr.mxu0 0.0
        %328 = vmatpush1.xpose.msra.mxu0 0.0
        %329 = vmatprep.subr.mxu0 0.0
        %330 = vmatpush1.xpose.msra.mxu0 0.0
        %331 = vmatprep.subr.mxu0 0.0
        %332 = vmatpush1.xpose.msra.mxu0 0.0
        %333 = vmatprep.subr.mxu0 0.0
        %334 = vmatpush1.xpose.msra.mxu0 0.0
        %335 = vmatprep.subr.mxu0 0.0
        %336 = vmatpush1.xpose.msra.mxu0 0.0
        %337 = vmatprep.subr.mxu0 0.0
        %338 = vmatpush1.xpose.msra.mxu0 0.0
        %339 = vmatprep.subr.mxu0 0.0
        %340 = vmatpush1.xpose.msra.mxu0 0.0
        %341 = vmatprep.subr.mxu0 0.0
        %342 = vmatpush1.xpose.msra.mxu0 0.0
        %343 = vmatprep.subr.mxu0 0.0
        %344 = vmatpush1.xpose.msra.mxu0 0.0
        %345 = vmatprep.subr.mxu0 0.0
        %346 = vmatpush1.xpose.msra.mxu0 0.0
        %347 = vmatprep.subr.mxu0 0.0
        %348 = vmatpush1.xpose.msra.mxu0 0.0
        %349 = vmatprep.subr.mxu0 0.0
        %350 = vmatpush1.xpose.msra.mxu0 0.0
        %351 = vmatprep.subr.mxu0 0.0
        %352 = vmatpush1.xpose.msra.mxu0 0.0
        %353 = vmatprep.subr.mxu0 0.0
        %354 = vmatpush1.xpose.msra.mxu0 %v321
        %355 = vmatprep.subr.mxu0 0.0
        %356 = vmatpush2.xpose.msra.mxu0 0.0
        %357 = vmatprep.subr.mxu0 0.0
        %358 = vmatpush2.xpose.msra.mxu0 0.0
        %359 = vmatprep.subr.mxu0 0.0
        %360 = vmatpush2.xpose.msra.mxu0 0.0
        %361 = vmatprep.subr.mxu0 0.0
        %362 = vmatpush2.xpose.msra.mxu0 0.0
        %363 = vmatprep.subr.mxu0 0.0
        %364 = vmatpush2.xpose.msra.mxu0 0.0
        %365 = vmatprep.subr.mxu0 0.0
        %366 = vmatpush2.xpose.msra.mxu0 0.0
        %367 = vmatprep.subr.mxu0 0.0
        %368 = vmatpush2.xpose.msra.mxu0 0.0
        %369 = vmatprep.subr.mxu0 0.0
        %370 = vmatpush2.xpose.msra.mxu0 0.0
        %371 = vmatprep.subr.mxu0 0.0
        %372 = vmatpush2.xpose.msra.mxu0 0.0
        %373 = vmatprep.subr.mxu0 0.0
        %374 = vmatpush2.xpose.msra.mxu0 0.0
        %375 = vmatprep.subr.mxu0 0.0
        %376 = vmatpush2.xpose.msra.mxu0 0.0
        %377 = vmatprep.subr.mxu0 0.0
        %378 = vmatpush2.xpose.msra.mxu0 0.0
        %379 = vmatprep.subr.mxu0 0.0
        %380 = vmatpush2.xpose.msra.mxu0 0.0
        %381 = vmatprep.subr.mxu0 0.0
        %382 = vmatpush2.xpose.msra.mxu0 0.0
        %383 = vmatprep.subr.mxu0 0.0
        %384 = vmatpush2.xpose.msra.mxu0 0.0
        %385 = vmatprep.subr.mxu0 0.0
        %386 = vmatpush2.xpose.msra.mxu0 0.0
        %387 = vmatprep.mubr.f32.mxu0 0.0
        %388 = vmatmul.mubr.f32.gmra.mxu0 %v318
        %v389 = vpop.f32.mrf.mxu0
        %v390 = vadd.f32 0.0, %v389
        %v391 = vpop.f32.mrf.mxu0
        %392 = vdwg.mxu0
        %v393 = vmul.f32 %v390, 0.25
        %vm394 = vcmask 64512
        %v395 = vsel %vm394, %v393, -inf
        %396 = vmax.xlane.f32.xlu0 %v395
        %v397 = vpop.xlane.xlu0 %396
        %v398 = vsub.f32 %v393, %v397
        %v399 = vmul.f32 %v398, 1.442695
        %v400 = vpow.pop %v399
        %v401 = vsel %vm394, %v400, 0.0
        %402 = vadd.xlane.f32.xlu0 %v401
        %v403 = vpop.xlane.xlu0 %402
        %v404 = vrcp.pop %v403
        %v405 = vmul.f32 %v400, %v404
        %406 = vst.msk [vmem:[%s313] sm:$0xff] %vm394, %v405
        %v407 = vld [vmem:[%s274] sm:$0xff]
        %v409 = vsel %vm394, %v405, 0
        %411 = vmatprep.subr.mxu0 0.0
        %412 = vmatpush1.msra.mxu0 0.0
        %413 = vmatprep.subr.mxu0 0.0
        %414 = vmatpush1.msra.mxu0 0.0
        %415 = vmatprep.subr.mxu0 0.0
        %416 = vmatpush1.msra.mxu0 0.0
        %417 = vmatprep.subr.mxu0 0.0
        %418 = vmatpush1.msra.mxu0 0.0
        %419 = vmatprep.subr.mxu0 0.0
        %420 = vmatpush1.msra.mxu0 0.0
        %421 = vmatprep.subr.mxu0 0.0
        %422 = vmatpush1.msra.mxu0 0.0
        %423 = vmatprep.subr.mxu0 0.0
        %424 = vmatpush1.msra.mxu0 0.0
        %425 = vmatprep.subr.mxu0 0.0
        %426 = vmatpush1.msra.mxu0 0.0
        %427 = vmatprep.subr.mxu0 0.0
        %428 = vmatpush1.msra.mxu0 0.0
        %429 = vmatprep.subr.mxu0 0.0
        %430 = vmatpush1.msra.mxu0 0.0
        %431 = vmatprep.subr.mxu0 0.0
        %432 = vmatpush1.msra.mxu0 0.0
        %433 = vmatprep.subr.mxu0 0.0
        %434 = vmatpush1.msra.mxu0 0.0
        %435 = vmatprep.subr.mxu0 0.0
        %436 = vmatpush1.msra.mxu0 0.0
        %437 = vmatprep.subr.mxu0 0.0
        %438 = vmatpush1.msra.mxu0 0.0
        %439 = vmatprep.subr.mxu0 0.0
        %440 = vmatpush1.msra.mxu0 0.0
        %441 = vmatprep.subr.mxu0 0.0
        %442 = vmatpush1.msra.mxu0 %v407
        %443 = vmatprep.subr.mxu0 0.0
        %444 = vmatpush2.msra.mxu0 0.0
        %445 = vmatprep.subr.mxu0 0.0
        %446 = vmatpush2.msra.mxu0 0.0
        %447 = vmatprep.subr.mxu0 0.0
        %448 = vmatpush2.msra.mxu0 0.0
        %449 = vmatprep.subr.mxu0 0.0
        %450 = vmatpush2.msra.mxu0 0.0
        %451 = vmatprep.subr.mxu0 0.0
        %452 = vmatpush2.msra.mxu0 0.0
        %453 = vmatprep.subr.mxu0 0.0
        %454 = vmatpush2.msra.mxu0 0.0
        %455 = vmatprep.subr.mxu0 0.0
        %456 = vmatpush2.msra.mxu0 0.0
        %457 = vmatprep.subr.mxu0 0.0
        %458 = vmatpush2.msra.mxu0 0.0
        %459 = vmatprep.subr.mxu0 0.0
        %460 = vmatpush2.msra.mxu0 0.0
        %461 = vmatprep.subr.mxu0 0.0
        %462 = vmatpush2.msra.mxu0 0.0
        %463 = vmatprep.subr.mxu0 0.0
        %464 = vmatpush2.msra.mxu0 0.0
        %465 = vmatprep.subr.mxu0 0.0
        %466 = vmatpush2.msra.mxu0 0.0
        %467 = vmatprep.subr.mxu0 0.0
        %468 = vmatpush2.msra.mxu0 0.0
        %469 = vmatprep.subr.mxu0 0.0
        %470 = vmatpush2.msra.mxu0 0.0
        %471 = vmatprep.subr.mxu0 0.0
        %472 = vmatpush2.msra.mxu0 0.0
        %473 = vmatprep.subr.mxu0 0.0
        %474 = vmatpush2.msra.mxu0 0.0
        %475 = vmatprep.mubr.f32.mxu0 0.0
        %476 = vmatmul.mubr.f32.gmra.mxu0 %v409
        %v477 = vpop.f32.mrf.mxu0
        %v478 = vadd.f32 0.0, %v477
        %v479 = vpop.f32.mrf.mxu0
        %480 = vdwg.mxu0
        %481 = vst.msk [vmem:[%s306] sm:$0xff] %vm316, %v478
        %s482 = sand.u32 %s130, 1
        %s483 = scalar_lea.sflag [#allocation4], %s482
        %s484 = sand.u32 %s130, 1
        %s485 = smul.addr %s484, 8
        %s486 = scalar_lea.vmem [#allocation8], %s485
        %s487 = sand.u32 %s158, 1
        %s488 = scalar_lea.sflag [#allocation10], %s487
        %s489 = sand.u32 %s158, 1
        %s490 = smul.addr %s489, 8
        %s491 = scalar_lea.vmem [#allocation9], %s490
        // Predicated region
        $region45: #{tpu_custom_call.1} parent=31 // pred_check
          %p492 = pneg %p140
        $region46: #{tpu_custom_call.1} parent=31 // pred_check_branch
          %494 = sbr.rel (%p492) target = $region48
        $region47: #{tpu_custom_call.1} parent=31 // pred_region
          %s496 = ssub.s32 128, 128
          %497 = vsyncadd %s483, %s496
          %s498 = sadd.s32 %s33, %s32
          %s499 = smul.addr %s498, 128
          %s500 = scalar_lea.hbm %s3, %s499
          %s502 = sshll.u32 %s486, 4
          %s503 = int_to_ptr.vmem [resolvable:$true] %s502
          %505 = dma.vmem_to_hbm [thread:$0]  %s503, 128, %s500, %s483
        $region48: #{tpu_custom_call.1} parent=31 // pred_fallthru
          _
        // Predicated region
        $region49: #{tpu_custom_call.1} parent=31 // pred_check
          %p506 = pneg %p168
        $region50: #{tpu_custom_call.1} parent=31 // pred_check_branch
          %508 = sbr.rel (%p506) target = $region52
        $region51: #{tpu_custom_call.1} parent=31 // pred_region
          %s510 = ssub.s32 128, 128
          %511 = vsyncadd %s488, %s510
          %s512 = sadd.s32 %s33, %s32
          %s513 = smul.addr %s512, 128
          %s514 = scalar_lea.hbm %s4, %s513
          %s516 = sshll.u32 %s491, 4
          %s517 = int_to_ptr.vmem [resolvable:$true] %s516
          %519 = dma.vmem_to_hbm [thread:$0]  %s517, 128, %s514, %s488
        $region52: #{tpu_custom_call.1} parent=31 // pred_fallthru
          _
      $region32: #{tpu_custom_call.1} parent=5 // pred_fallthru
        _
      %p520 = scmp.le.s32.totalorder 2, %s23
      // Predicated region
      $region53: #{tpu_custom_call.1} parent=5 // pred_check
        %p521 = pneg %p520
      $region54: #{tpu_custom_call.1} parent=5 // pred_check_branch
        %523 = sbr.rel (%p521) target = $region56
      $region55: #{tpu_custom_call.1} parent=5 // pred_region
        %s524 = ssub.s32 %s23, 2
        // Predicated region
        $region57: #{tpu_custom_call.1} parent=55 // pred_check
          %p525 = pneg %p146
        $region58: #{tpu_custom_call.1} parent=55 // pred_check_branch
          %527 = sbr.rel (%p525) target = $region60
        $region59: #{tpu_custom_call.1} parent=55 // pred_region
          %s528 = sand.u32 %s131, 1
          %s529 = scalar_lea.sflag [#allocation4], %s528
          %s530 = sand.u32 %s131, 1
          %s531 = smul.addr %s530, 8
          %s532 = scalar_lea.vmem [#allocation8], %s531
          %533 = dma.done %s529, 128
        $region60: #{tpu_custom_call.1} parent=55 // pred_fallthru
          _
        // Predicated region
        $region61: #{tpu_custom_call.1} parent=55 // pred_check
          %p534 = pneg %p174
        $region62: #{tpu_custom_call.1} parent=55 // pred_check_branch
          %536 = sbr.rel (%p534) target = $region64
        $region63: #{tpu_custom_call.1} parent=55 // pred_region
          %s537 = sand.u32 %s159, 1
          %s538 = scalar_lea.sflag [#allocation10], %s537
          %s539 = sand.u32 %s159, 1
          %s540 = smul.addr %s539, 8
          %s541 = scalar_lea.vmem [#allocation9], %s540
          %542 = dma.done %s538, 128
        $region64: #{tpu_custom_call.1} parent=55 // pred_fallthru
          _
      $region56: #{tpu_custom_call.1} parent=5 // pred_fallthru
        _
    $region6: #{tpu_custom_call.1} parent=1 // loop_footer
      %s27 = sadd.s32 1, %s23
    $region7: #{tpu_custom_call.1} parent=1 // loop_footer_branch
      %22 = sbr.rel target = $region3
    $region8: #{tpu_custom_call.1} parent=1 // loop_exit
      _
    %543 = vsyncpa [#allocation3], 1
    %s544 = scalar_lea.sflag [#allocation3], 1
    %545 = vsyncpa %s544, 1
    %546 = vsyncpa [#allocation6], 1
    %s547 = scalar_lea.sflag [#allocation6], 1
    %548 = vsyncpa %s547, 1
    %549 = vsyncpa [#allocation4], 1
    %s550 = scalar_lea.sflag [#allocation4], 1
    %551 = vsyncpa %s550, 1
    %552 = vsyncpa [#allocation10], 1
    %s553 = scalar_lea.sflag [#allocation10], 1
    %554 = vsyncpa %s553, 1

</llo_original>
